<compile_context>
chip_gen: v5e
topology: v5e:2x2
jax: 0.10.0
libtpu: 0.0.40
codegen_flags: <defaults>
</compile_context>

<pallas_src>
import functools
import math

import jax
import jax.numpy as jnp
from jax.experimental import pallas as pl
from jax.experimental.pallas import tpu as pltpu

_LANE = 128
_SUBLANE = 8


def _round_up(n, m):
    return ((n + m - 1) // m) * m


@functools.lru_cache(maxsize=1)
def _vmem_capacity_bytes():
    """Per-core VMEM capacity; conservative (v7x-sized) fallback if unknown."""
    try:
        info = pltpu.get_tpu_info()
        cap = int(getattr(info, "vmem_capacity_bytes", 0) or 0)
        if cap > 0:
            return cap
    except Exception:
        pass
    return 64 << 20


def _pick_tb(batch, cap_rows):
    """Largest legal batch tile <= cap_rows: either the full batch (always
    layout-legal as block dim == array dim) or a multiple of 8 sublanes."""
    cap_rows = max(int(cap_rows), _SUBLANE)
    if cap_rows >= batch:
        return batch
    return max(_SUBLANE, (cap_rows // _SUBLANE) * _SUBLANE)


# ---------------------------------------------------------------------------
# Kernels (fc1 -> relu -> fc2 fused; hidden activation never leaves VMEM)
# ---------------------------------------------------------------------------

def _aggregate_kernel_2layer(x_ref, w1_ref, b1_ref, w2_ref, b2_ref, o_ref):
    h = jnp.dot(x_ref[...], w1_ref[...], preferred_element_type=jnp.float32)
    h = jnp.maximum(h + b1_ref[...], 0.0)                       # bias + ReLU in f32 (VPU)
    y = jnp.dot(h.astype(w2_ref.dtype), w2_ref[...],
                preferred_element_type=jnp.float32)
    o_ref[...] = (y + b2_ref[...]).astype(o_ref.dtype)


def _aggregate_kernel_1layer(x_ref, w2_ref, b2_ref, o_ref):
    y = jnp.dot(x_ref[...], w2_ref[...], preferred_element_type=jnp.float32)
    o_ref[...] = (y + b2_ref[...]).astype(o_ref.dtype)


# ---------------------------------------------------------------------------
# Wrapper
# ---------------------------------------------------------------------------

@functools.partial(jax.jit, static_argnames=("layer", "compute_dtype", "block_b"))
def aggregate_forward(x, params, *, layer=2, compute_dtype=jnp.float32, block_b=None):
    """x: (B, num_concepts). Returns (B, 10) in x.dtype."""
    B, C = x.shape
    NC = params["w2"].shape[1]
    cdt = jnp.dtype(compute_dtype)
    out_dtype = x.dtype

    # ---- generation-aware VMEM budget (v5e/v6e: 128 MiB, v7x: 64 MiB) ----
    cap = _vmem_capacity_bytes()
    if cap >= (96 << 20):
        fit_budget, limit_cap, default_tb = 90 << 20, 98 << 20, 1024
    else:
        fit_budget, limit_cap, default_tb = 44 << 20, 50 << 20, 512

    # Resident weight/bias footprint in VMEM.
    if layer != 1:
        w_bytes = (C * C + C * NC) * cdt.itemsize + (C + NC) * 4
    else:
        w_bytes = (C * NC) * cdt.itemsize + NC * 4
    # Large resident weights: single-buffer them (their block index never
    # changes, so the default second buffer is pure VMEM waste). Tiny weights
    # (this module's common case) stay on the default double-buffered path.
    single_buf_w = w_bytes > (2 << 20)
    wbuf_mult = 1 if single_buf_w else 2

    x_item = cdt.itemsize                      # x is DMA'd in the compute dtype
    out_item = jnp.dtype(out_dtype).itemsize

    def need_bytes(tb):
        io = 2 * tb * C * x_item + 2 * tb * NC * out_item   # double-buffered x / out
        return io + wbuf_mult * w_bytes + (2 << 20)          # + internal headroom

    # ---- batch tile selection ----
    tb = _pick_tb(B, block_b if block_b is not None else default_tb)
    while need_bytes(tb) > fit_budget and tb > _SUBLANE:
        new_tb = _pick_tb(B, tb // 2)
        if new_tb == tb:
            break
        tb = new_tb
    # v7x megacore: make sure there are >= 2 batch tiles to shard across the
    # two TensorCores (harmless extra grid step on single-core v5e/v6e).
    if tb >= B and B > _SUBLANE:
        tb = min(_round_up(pl.cdiv(B, 2), _SUBLANE), B)

    grid = (pl.cdiv(B, tb),)
    vmem_limit = int(min(max(need_bytes(tb) + (4 << 20), 32 << 20), limit_cap))

    # ---- operand prep (no padding; only a dtype cast when compute is bf16) ----
    xp = x if x.dtype == cdt else x.astype(cdt)
    w2 = params["w2"].astype(cdt)
    b2 = params["b2"].reshape(1, -1).astype(jnp.float32)

    x_spec = pl.BlockSpec((tb, C), lambda i: (i, 0))
    out_spec = pl.BlockSpec((tb, NC), lambda i: (i, 0))
    w_kwargs = dict(pipeline_mode=pl.Buffered(1)) if single_buf_w else {}

    def const(shape):                      # resident (constant block index) operand
        return pl.BlockSpec(shape, lambda i: (0, 0), **w_kwargs)

    out_shape = jax.ShapeDtypeStruct((B, NC), out_dtype)
    compiler_params = pltpu.CompilerParams(
        dimension_semantics=("parallel",),   # batch tiles split across v7x TCs
        vmem_limit_bytes=vmem_limit,
    )

    if layer != 1:
        w1 = params["w1"].astype(cdt)
        b1 = params["b1"].reshape(1, -1).astype(jnp.float32)
        cost = pl.CostEstimate(
            flops=2 * B * C * (C + NC),
            transcendentals=0,
            bytes_accessed=(B * C * x_item
                            + (w1.size + w2.size) * cdt.itemsize
                            + (b1.size + b2.size) * 4
                            + B * NC * out_item),
        )
        return pl.pallas_call(
            _aggregate_kernel_2layer,
            out_shape=out_shape,
            grid=grid,
            in_specs=[x_spec,
                      const((C, C)), const((1, C)),
                      const((C, NC)), const((1, NC))],
            out_specs=out_spec,
            compiler_params=compiler_params,
            cost_estimate=cost,
        )(xp, w1, b1, w2, b2)
    else:
        cost = pl.CostEstimate(
            flops=2 * B * C * NC,
            transcendentals=0,
            bytes_accessed=(B * C * x_item + w2.size * cdt.itemsize
                            + b2.size * 4 + B * NC * out_item),
        )
        return pl.pallas_call(
            _aggregate_kernel_1layer,
            out_shape=out_shape,
            grid=grid,
            in_specs=[x_spec, const((C, NC)), const((1, NC))],
            out_specs=out_spec,
            compiler_params=compiler_params,
            cost_estimate=cost,
        )(xp, w2, b2)


# ---------------------------------------------------------------------------
# Params / reference
# ---------------------------------------------------------------------------

def init_params(key, num_concepts, num_classes=10, dtype=jnp.float32):
    """nn.Linear-shaped params; weights stored transposed as (in, out)."""
    k1, k2, k3, k4 = jax.random.split(key, 4)
    s1 = 1.0 / math.sqrt(num_concepts)
    w1 = jax.random.uniform(k1, (num_concepts, num_concepts), dtype, -s1, s1)
    b1 = jax.random.uniform(k2, (1, num_concepts), dtype, -s1, s1)
    w2 = jax.random.uniform(k3, (num_concepts, num_classes), dtype, -s1, s1)
    b2 = jax.random.uniform(k4, (1, num_classes), dtype, -s1, s1)
    return {"w1": w1, "b1": b1, "w2": w2, "b2": b2}


def _reference_forward(x, params, layer=2):
    h = x
    if layer != 1:
        h = jnp.maximum(h @ params["w1"] + params["b1"], 0.0)
    return h @ params["w2"] + params["b2"]


# ---------------------------------------------------------------------------
# Demo / correctness check
# ---------------------------------------------------------------------------

if __name__ == "__main__":
    key = jax.random.PRNGKey(0)
    kx, kp, kx2, kp2 = jax.random.split(key, 4)

    batch, num_concepts = 8, 32
    x = jax.random.normal(kx, (batch, num_concepts), dtype=jnp.float32)
    params = init_params(kp, num_concepts)

    # two-layer path (args.layer != 1) and single-layer path (args.layer == 1)
    out2 = jax.block_until_ready(aggregate_forward(x, params, layer=2))
    out1 = jax.block_until_ready(aggregate_forward(x, params, layer=1))
    ref2 = _reference_forward(x, params, layer=2)
    ref1 = _reference_forward(x, params, layer=1)
    assert out2.shape == (batch, 10) and out1.shape == (batch, 10)
    assert jnp.allclose(out2, ref2, atol=1e-5, rtol=1e-5)
    assert jnp.allclose(out1, ref1, atol=1e-5, rtol=1e-5)

    # bf16 fast path: x/weights DMA'd as bf16, f32 accumulate -> bounded error.
    out_bf = jax.block_until_ready(
        aggregate_forward(x, params, layer=2, compute_dtype=jnp.bfloat16))
    assert jnp.allclose(out_bf, ref2, atol=5e-2, rtol=5e-2)

    # Non-aligned feature dim, multi-tile grid, ragged last batch block.
    b_big, c_big = 300, 100
    xb = jax.random.normal(kx2, (b_big, c_big), dtype=jnp.float32)
    pb = init_params(kp2, c_big)
    outb = jax.block_until_ready(aggregate_forward(xb, pb, layer=2, block_b=128))
    refb = _reference_forward(xb, pb, layer=2)
    assert outb.shape == (b_big, 10)
    assert jnp.allclose(outb, refb, atol=1e-4, rtol=1e-4)

    # Tiny batch (< one sublane): full-batch block path.
    xt = jax.random.normal(kx, (2, num_concepts), dtype=jnp.float32)
    outt = jax.block_until_ready(aggregate_forward(xt, params, layer=2))
    assert jnp.allclose(outt, _reference_forward(xt, params, layer=2),
                        atol=1e-5, rtol=1e-5)

    print("KERNEL_OK")
</pallas_src>

<mosaic_0001>
module attributes {stable_mosaic.version = 11 : i64} {
  func.func @_aggregate_kernel_2layer(%arg0: i32, %arg1: memref<8x32xf32, #tpu.memory_space<vmem>>, %arg2: memref<32x32xf32, #tpu.memory_space<vmem>>, %arg3: memref<1x32xf32, #tpu.memory_space<vmem>>, %arg4: memref<32x10xf32, #tpu.memory_space<vmem>>, %arg5: memref<1x10xf32, #tpu.memory_space<vmem>>, %arg6: memref<8x10xf32, #tpu.memory_space<vmem>>) attributes {dimension_semantics = [#tpu.dimension_semantics<parallel>], iteration_bounds = array<i64: 1>, scalar_prefetch = 0 : i64, scratch_operands = 0 : i64, tpu.core_type = #tpu.core_type<tc>, window_params = [{transform_indices = @transform_0, window_bounds = array<i64: 8, 32>}, {pipeline_mode = #tpu.pipeline_mode<synchronous>, transform_indices = @transform_1, window_bounds = array<i64: 32, 32>}, {pipeline_mode = #tpu.pipeline_mode<synchronous>, transform_indices = @transform_2, window_bounds = array<i64: 1, 32>}, {pipeline_mode = #tpu.pipeline_mode<synchronous>, transform_indices = @transform_3, window_bounds = array<i64: 32, 10>}, {pipeline_mode = #tpu.pipeline_mode<synchronous>, transform_indices = @transform_4, window_bounds = array<i64: 1, 10>}, {transform_indices = @transform_5, window_bounds = array<i64: 8, 10>}]} {
    %c0 = arith.constant 0 : index
    %c0_0 = arith.constant 0 : index
    %0 = vector.load %arg1[%c0, %c0_0] : memref<8x32xf32, #tpu.memory_space<vmem>>, vector<8x32xf32>
    %c0_1 = arith.constant 0 : index
    %c0_2 = arith.constant 0 : index
    %1 = vector.load %arg2[%c0_1, %c0_2] : memref<32x32xf32, #tpu.memory_space<vmem>>, vector<32x32xf32>
    %cst = arith.constant dense<0.000000e+00> : vector<8x32xf32>
    %2 = tpu.matmul %0, %1, %cst {dimension_numbers = #tpu.dot_dimension_numbers<[1], [0], [0], [1], [0, 0, 1, 1], [], []>} : vector<8x32xf32>, vector<32x32xf32>, vector<8x32xf32> -> vector<8x32xf32>
    %c0_3 = arith.constant 0 : index
    %c0_4 = arith.constant 0 : index
    %3 = vector.load %arg3[%c0_3, %c0_4] : memref<1x32xf32, #tpu.memory_space<vmem>>, vector<1x32xf32>
    %4 = vector.broadcast %3 : vector<1x32xf32> to vector<8x32xf32>
    %5 = arith.addf %2, %4 : vector<8x32xf32>
    %cst_5 = arith.constant 0.000000e+00 : f32
    %6 = vector.broadcast %cst_5 : f32 to vector<8x32xf32>
    %7 = arith.maximumf %5, %6 : vector<8x32xf32>
    %c0_6 = arith.constant 0 : index
    %c0_7 = arith.constant 0 : index
    %8 = vector.load %arg4[%c0_6, %c0_7] : memref<32x10xf32, #tpu.memory_space<vmem>>, vector<32x10xf32>
    %cst_8 = arith.constant dense<0.000000e+00> : vector<8x10xf32>
    %9 = tpu.matmul %7, %8, %cst_8 {dimension_numbers = #tpu.dot_dimension_numbers<[1], [0], [0], [1], [0, 0, 1, 1], [], []>} : vector<8x32xf32>, vector<32x10xf32>, vector<8x10xf32> -> vector<8x10xf32>
    %c0_9 = arith.constant 0 : index
    %c0_10 = arith.constant 0 : index
    %10 = vector.load %arg5[%c0_9, %c0_10] : memref<1x10xf32, #tpu.memory_space<vmem>>, vector<1x10xf32>
    %11 = vector.broadcast %10 : vector<1x10xf32> to vector<8x10xf32>
    %12 = arith.addf %9, %11 : vector<8x10xf32>
    %c0_11 = arith.constant 0 : index
    %c0_12 = arith.constant 0 : index
    %13 = vector.load %arg6[%c0_11, %c0_12] : memref<8x10xf32, #tpu.memory_space<vmem>>, vector<8x10xf32>
    tpu.vector_store %arg6[%c0_11, %c0_12], %12 {strides = array<i32>} : memref<8x10xf32, #tpu.memory_space<vmem>>, vector<8x10xf32>,
    return
  }
  func.func @transform_0(%arg0: i32) -> (i32, i32) {
    %c0_i32 = arith.constant 0 : i32
    %c0_i32_0 = arith.constant 0 : i32
    return %arg0, %c0_i32 : i32, i32
  }
  func.func @transform_1(%arg0: i32) -> (i32, i32) {
    %c0_i32 = arith.constant 0 : i32
    %c0_i32_0 = arith.constant 0 : i32
    %c0_i32_1 = arith.constant 0 : i32
    return %c0_i32, %c0_i32_0 : i32, i32
  }
  func.func @transform_2(%arg0: i32) -> (i32, i32) {
    %c0_i32 = arith.constant 0 : i32
    %c0_i32_0 = arith.constant 0 : i32
    %c0_i32_1 = arith.constant 0 : i32
    return %c0_i32, %c0_i32_0 : i32, i32
  }
  func.func @transform_3(%arg0: i32) -> (i32, i32) {
    %c0_i32 = arith.constant 0 : i32
    %c0_i32_0 = arith.constant 0 : i32
    %c0_i32_1 = arith.constant 0 : i32
    return %c0_i32, %c0_i32_0 : i32, i32
  }
  func.func @transform_4(%arg0: i32) -> (i32, i32) {
    %c0_i32 = arith.constant 0 : i32
    %c0_i32_0 = arith.constant 0 : i32
    %c0_i32_1 = arith.constant 0 : i32
    return %c0_i32, %c0_i32_0 : i32, i32
  }
  func.func @transform_5(%arg0: i32) -> (i32, i32) {
    %c0_i32 = arith.constant 0 : i32
    %c0_i32_0 = arith.constant 0 : i32
    return %arg0, %c0_i32 : i32, i32
  }
}

</mosaic_0001>

<llo_original>
// kernel: aggregate_forward.1
$region0: #{aggregate_forward.1}
  #allocation0 [shape = 'u32[]', space=smem, size = 0x4, offset = 0x4, fixed_abs, tag = 'smem constant byte address 0x4 - core index']
  #allocation1 [shape = 'u32[72,128]{1,0:T(1,128)}', space=vmem, size = 0x9000, scoped, tag = 'internal scratch']
  %s0 = inlined_call_operand.vmem [shape: f32[8,32], index: 0, kind: input, shape index: {}]
  %s1 = inlined_call_operand.vmem [shape: f32[32,32], index: 1, kind: input, shape index: {}]
  %s2 = inlined_call_operand.vmem [shape: f32[1,32], index: 2, kind: input, shape index: {}]
  %s3 = inlined_call_operand.vmem [shape: f32[32,10], index: 3, kind: input, shape index: {}]
  %s4 = inlined_call_operand.vmem [shape: f32[1,10], index: 4, kind: input, shape index: {}]
  %s5 = inlined_call_operand.hbm [shape: f32[8,10], index: 5, kind: output, shape index: {}]
  %s6 = sld [smem:[#allocation0]]
  $region30: #{aggregate_forward.1} parent=0
    _
  %s8 = ssub.s32 1, %s6
  %s9 = scalar_select 0, %s8, %s6
  $region1: #{aggregate_forward.1} parent=0
    #allocation2 [shape = 'u8[4096]{0}', space=vmem, size = 0x1000, scoped, tag = 'output window, operand 0, single buffered']
    #allocation3 [shape = 's32[1]{0}', space=sflag, size = 0x4, scoped, tag = 'scoped memory for aggregate_forward.1']
    %10 = vsyncpa [#allocation3], 0
    // Predicated region
    $region2: #{aggregate_forward.1} parent=1 // pred_check
      _
    $region3: #{aggregate_forward.1} parent=1 // pred_check_branch
      %12 = sbr.rel (0) target = $region5
    $region4: #{aggregate_forward.1} parent=1 // pred_region
      _
    $region5: #{aggregate_forward.1} parent=1 // pred_fallthru
      _
    // Predicated region
    $region6: #{aggregate_forward.1} parent=1 // pred_check
      _
    $region7: #{aggregate_forward.1} parent=1 // pred_check_branch
      %14 = sbr.rel (0) target = $region9
    $region8: #{aggregate_forward.1} parent=1 // pred_region
      _
    $region9: #{aggregate_forward.1} parent=1 // pred_fallthru
      _
    // Predicated region
    $region10: #{aggregate_forward.1} parent=1 // pred_check
      _
    $region11: #{aggregate_forward.1} parent=1 // pred_check_branch
      %16 = sbr.rel (0) target = $region13
    $region12: #{aggregate_forward.1} parent=1 // pred_region
      _
    $region13: #{aggregate_forward.1} parent=1 // pred_fallthru
      _
    // Predicated region
    $region14: #{aggregate_forward.1} parent=1 // pred_check
      _
    $region15: #{aggregate_forward.1} parent=1 // pred_check_branch
      %18 = sbr.rel (0) target = $region17
    $region16: #{aggregate_forward.1} parent=1 // pred_region
      _
    $region17: #{aggregate_forward.1} parent=1 // pred_fallthru
      _
    // Predicated region
    $region18: #{aggregate_forward.1} parent=1 // pred_check
      _
    $region19: #{aggregate_forward.1} parent=1 // pred_check_branch
      %20 = sbr.rel (0) target = $region21
    $region20: #{aggregate_forward.1} parent=1 // pred_region
      _
    $region21: #{aggregate_forward.1} parent=1 // pred_fallthru
      _
    %v21 = vld [vmem:[%s0] sm:$0xff]
    %v22 = vld [vmem:[%s1] sm:$0xff]
    %v23 = vld [vmem:[%s1 + $0x8] sm:$0xff]
    %v24 = vld [vmem:[%s1 + $0x10] sm:$0xff]
    %v25 = vld [vmem:[%s1 + $0x18] sm:$0xff]
    %v26 = vld [vmem:[%s2] sm:$0x1]
    %v28 = vperm.slane %v26, 0
    %vm30 = vcmask 261120
    %v32 = vsel %vm30, %v21, 0
    %34 = vmatpush.msra.mxu0 0.0
    %35 = vmatpush.msra.mxu0 0.0
    %36 = vmatpush.msra.mxu0 0.0
    %37 = vmatpush.msra.mxu0 0.0
    %38 = vmatpush.msra.mxu0 0.0
    %39 = vmatpush.msra.mxu0 0.0
    %40 = vmatpush.msra.mxu0 0.0
    %41 = vmatpush.msra.mxu0 0.0
    %42 = vmatpush.msra.mxu0 0.0
    %43 = vmatpush.msra.mxu0 0.0
    %44 = vmatpush.msra.mxu0 0.0
    %45 = vmatpush.msra.mxu0 0.0
    %46 = vmatpush.msra.mxu0 %v25
    %47 = vmatpush.msra.mxu0 %v24
    %48 = vmatpush.msra.mxu0 %v23
    %49 = vmatpush.msra.mxu0 %v22
    %50 = vmatmul.f32.gmra.mxu0 %v32
    %v51 = vpop.f32.mrf.mxu0
    %v52 = vadd.f32 %v28, %v51
    %53 = vdwg.mxu0
    %v54 = vmax.f32 %v52, 0.0
    %v55 = vld [vmem:[%s3] sm:$0xff]
    %v56 = vld [vmem:[%s3 + $0x8] sm:$0xff]
    %v57 = vld [vmem:[%s3 + $0x10] sm:$0xff]
    %v58 = vld [vmem:[%s3 + $0x18] sm:$0xff]
    %v59 = vld [vmem:[%s4] sm:$0x1]
    %v61 = vperm.slane %v59, 0
    %v64 = vsel %vm30, %v54, 0
    %66 = vmatpush.msra.mxu0 0.0
    %67 = vmatpush.msra.mxu0 0.0
    %68 = vmatpush.msra.mxu0 0.0
    %69 = vmatpush.msra.mxu0 0.0
    %70 = vmatpush.msra.mxu0 0.0
    %71 = vmatpush.msra.mxu0 0.0
    %72 = vmatpush.msra.mxu0 0.0
    %73 = vmatpush.msra.mxu0 0.0
    %74 = vmatpush.msra.mxu0 0.0
    %75 = vmatpush.msra.mxu0 0.0
    %76 = vmatpush.msra.mxu0 0.0
    %77 = vmatpush.msra.mxu0 0.0
    %78 = vmatpush.msra.mxu0 %v58
    %79 = vmatpush.msra.mxu0 %v57
    %80 = vmatpush.msra.mxu0 %v56
    %81 = vmatpush.msra.mxu0 %v55
    %82 = vmatmul.f32.gmra.mxu0 %v64
    %v83 = vpop.f32.mrf.mxu0
    %v84 = vadd.f32 %v61, %v83
    %85 = vdwg.mxu0
    %vm86 = vcmask 80896
    %87 = vst.msk [vmem:[#allocation2] sm:$0xff] %vm86, %v84
    // Predicated region
    $region22: #{aggregate_forward.1} parent=1 // pred_check
      _
    $region23: #{aggregate_forward.1} parent=1 // pred_check_branch
      %89 = sbr.rel (0) target = $region25
    $region24: #{aggregate_forward.1} parent=1 // pred_region
      %91 = vsyncadd [#allocation3], 0
      %s93 = sshll.u32 [#allocation2], 4
      %s94 = int_to_ptr.vmem [resolvable:$true] %s93
      %s95 = sshll.u32 %s5, 4
      %s96 = int_to_ptr.hbm [resolvable:$true] %s95
      %98 = dma.vmem_to_hbm [thread:$0]  %s94, 128, %s96, [#allocation3]
    $region25: #{aggregate_forward.1} parent=1 // pred_fallthru
      _
    // Predicated region
    $region26: #{aggregate_forward.1} parent=1 // pred_check
      _
    $region27: #{aggregate_forward.1} parent=1 // pred_check_branch
      %100 = sbr.rel (0) target = $region29
    $region28: #{aggregate_forward.1} parent=1 // pred_region
      %102 = dma.done [#allocation3], 128
    $region29: #{aggregate_forward.1} parent=1 // pred_fallthru
      _
    %103 = vsyncpa [#allocation3], 1

</llo_original>
